<compile_context>
chip_gen: v5e
topology: v5e:2x2
jax: 0.10.0
libtpu: 0.0.40
codegen_flags: <defaults>
</compile_context>

<pallas_src>
import jax
import jax.numpy as jnp
from jax.experimental import pallas as pl
from jax.experimental.pallas import tpu as pltpu

_LANE = 128      # lane width: last-dim alignment target
_SUBLANE = 8     # sublane width: second-to-last-dim alignment target


def _round_up(x, m):
    return (x + m - 1) // m * m


def mlp_kernel(x_ref, w1t_ref, w2t_ref, o_ref):
    # x_ref:  (TB, K_pad)        bf16   batch tile of activations
    # w1t_ref:(K_pad, H_pad)     bf16   W1.T, zero-padded, VMEM-resident
    # w2t_ref:(H_pad, N_pad)     bf16   W2.T, zero-padded, VMEM-resident
    # o_ref:  (TB, N_pad)        f32    lane-dense output tile
    h = jnp.dot(x_ref[...], w1t_ref[...], preferred_element_type=jnp.float32)
    out = jnp.dot(h.astype(jnp.bfloat16), w2t_ref[...],
                  preferred_element_type=jnp.float32)
    o_ref[...] = out.astype(o_ref.dtype)


def net_forward(x, w1, w2, *, batch_tile=256):
    """Forward of PyTorch `net`: (x @ w1.T) @ w2.T, both Linear layers bias-free.

    x : (B, num_input)            float32
    w1: (num_hidden, num_input)   PyTorch nn.Linear weight layout
    w2: (num_output, num_hidden)
    returns (B, num_output) float32
    """
    B, num_input = x.shape
    num_hidden, _ = w1.shape
    num_output, _ = w2.shape

    # Lane-aligned padded feature sizes (zero padding is exact for matmul).
    k_pad = _round_up(num_input, _LANE)
    h_pad = _round_up(num_hidden, _LANE)
    n_pad = _round_up(num_output, _LANE)

    # Batch tiling: amortize per-step overhead, keep weights resident in VMEM.
    tb = min(batch_tile, _round_up(B, _SUBLANE))
    b_pad = _round_up(B, tb)
    n_tiles = b_pad // tb

    # Pre-transpose weights once and cast everything to bf16 (f32 accumulate
    # stays inside the kernel). Zero padding keeps the math identical.
    x_p = jnp.zeros((b_pad, k_pad), jnp.bfloat16).at[
        :B, :num_input].set(x.astype(jnp.bfloat16))
    w1t = jnp.zeros((k_pad, h_pad), jnp.bfloat16).at[
        :num_input, :num_hidden].set(w1.T.astype(jnp.bfloat16))
    w2t = jnp.zeros((h_pad, n_pad), jnp.bfloat16).at[
        :num_hidden, :num_output].set(w2.T.astype(jnp.bfloat16))

    out_padded = pl.pallas_call(
        mlp_kernel,
        out_shape=jax.ShapeDtypeStruct((b_pad, n_pad), jnp.float32),
        grid=(n_tiles,),
        in_specs=[
            pl.BlockSpec((tb, k_pad), lambda i: (i, 0)),     # activations: tiled over batch
            pl.BlockSpec((k_pad, h_pad), lambda i: (0, 0)),  # W1.T: resident across tiles
            pl.BlockSpec((h_pad, n_pad), lambda i: (0, 0)),  # W2.T: resident across tiles
        ],
        out_specs=pl.BlockSpec((tb, n_pad), lambda i: (i, 0)),
        compiler_params=pltpu.CompilerParams(
            # Batch tiles are independent -> shard across TensorCores (v7x megacore).
            dimension_semantics=("parallel",),
        ),
    )(x_p, w1t, w2t)

    return out_padded[:B, :num_output]


def init_params(key, num_input, num_hidden, num_output, dtype=jnp.float32):
    # Deterministic init mimicking PyTorch Linear default:
    # U(-1/sqrt(fan_in), 1/sqrt(fan_in)), weight shape (out, in), no bias.
    k1, k2 = jax.random.split(key)
    b1 = 1.0 / jnp.sqrt(jnp.asarray(num_input, dtype))
    b2 = 1.0 / jnp.sqrt(jnp.asarray(num_hidden, dtype))
    w1 = jax.random.uniform(k1, (num_hidden, num_input), dtype, -b1, b1)
    w2 = jax.random.uniform(k2, (num_output, num_hidden), dtype, -b2, b2)
    return w1, w2


if __name__ == "__main__":
    num_input, num_hidden, num_output = 32, 64, 16
    batch = 8

    key = jax.random.PRNGKey(0)
    kx, kp = jax.random.split(key)
    x = jax.random.normal(kx, (batch, num_input), jnp.float32)
    w1, w2 = init_params(kp, num_input, num_hidden, num_output)

    out = net_forward(x, w1, w2)
    jax.block_until_ready(out)

    # Reference: plain JAX with the original (f32) module semantics.
    ref = (x @ w1.T) @ w2.T
    assert out.shape == (batch, num_output)
    # bf16 MXU inputs -> widened tolerance (f32 accumulation keeps error small).
    assert jnp.allclose(out, ref, atol=5e-2, rtol=5e-2)

    print("KERNEL_OK")
</pallas_src>

<mosaic_0001>
module attributes {stable_mosaic.version = 11 : i64} {
  func.func @mlp_kernel(%arg0: i32, %arg1: memref<8x128xbf16, #tpu.memory_space<vmem>>, %arg2: memref<128x128xbf16, #tpu.memory_space<vmem>>, %arg3: memref<128x128xbf16, #tpu.memory_space<vmem>>, %arg4: memref<8x128xf32, #tpu.memory_space<vmem>>) attributes {dimension_semantics = [#tpu.dimension_semantics<parallel>], iteration_bounds = array<i64: 1>, scalar_prefetch = 0 : i64, scratch_operands = 0 : i64, tpu.core_type = #tpu.core_type<tc>, window_params = [{transform_indices = @transform_0, window_bounds = array<i64: 8, 128>}, {pipeline_mode = #tpu.pipeline_mode<synchronous>, transform_indices = @transform_1, window_bounds = array<i64: 128, 128>}, {pipeline_mode = #tpu.pipeline_mode<synchronous>, transform_indices = @transform_2, window_bounds = array<i64: 128, 128>}, {transform_indices = @transform_3, window_bounds = array<i64: 8, 128>}]} {
    %c0 = arith.constant 0 : index
    %c0_0 = arith.constant 0 : index
    %0 = vector.load %arg1[%c0, %c0_0] : memref<8x128xbf16, #tpu.memory_space<vmem>>, vector<8x128xbf16>
    %c0_1 = arith.constant 0 : index
    %c0_2 = arith.constant 0 : index
    %1 = vector.load %arg2[%c0_1, %c0_2] : memref<128x128xbf16, #tpu.memory_space<vmem>>, vector<128x128xbf16>
    %cst = arith.constant dense<0.000000e+00> : vector<8x128xf32>
    %2 = tpu.matmul %0, %1, %cst {dimension_numbers = #tpu.dot_dimension_numbers<[1], [0], [0], [1], [0, 0, 1, 1], [], []>} : vector<8x128xbf16>, vector<128x128xbf16>, vector<8x128xf32> -> vector<8x128xf32>
    %3 = arith.truncf %2 : vector<8x128xf32> to vector<8x128xbf16>
    %c0_3 = arith.constant 0 : index
    %c0_4 = arith.constant 0 : index
    %4 = vector.load %arg3[%c0_3, %c0_4] : memref<128x128xbf16, #tpu.memory_space<vmem>>, vector<128x128xbf16>
    %cst_5 = arith.constant dense<0.000000e+00> : vector<8x128xf32>
    %5 = tpu.matmul %3, %4, %cst_5 {dimension_numbers = #tpu.dot_dimension_numbers<[1], [0], [0], [1], [0, 0, 1, 1], [], []>} : vector<8x128xbf16>, vector<128x128xbf16>, vector<8x128xf32> -> vector<8x128xf32>
    %c0_6 = arith.constant 0 : index
    %c0_7 = arith.constant 0 : index
    %6 = vector.load %arg4[%c0_6, %c0_7] : memref<8x128xf32, #tpu.memory_space<vmem>>, vector<8x128xf32>
    tpu.vector_store %arg4[%c0_6, %c0_7], %5 {strides = array<i32>} : memref<8x128xf32, #tpu.memory_space<vmem>>, vector<8x128xf32>,
    return
  }
  func.func @transform_0(%arg0: i32) -> (i32, i32) {
    %c0_i32 = arith.constant 0 : i32
    %c0_i32_0 = arith.constant 0 : i32
    return %arg0, %c0_i32 : i32, i32
  }
  func.func @transform_1(%arg0: i32) -> (i32, i32) {
    %c0_i32 = arith.constant 0 : i32
    %c0_i32_0 = arith.constant 0 : i32
    %c0_i32_1 = arith.constant 0 : i32
    return %c0_i32, %c0_i32_0 : i32, i32
  }
  func.func @transform_2(%arg0: i32) -> (i32, i32) {
    %c0_i32 = arith.constant 0 : i32
    %c0_i32_0 = arith.constant 0 : i32
    %c0_i32_1 = arith.constant 0 : i32
    return %c0_i32, %c0_i32_0 : i32, i32
  }
  func.func @transform_3(%arg0: i32) -> (i32, i32) {
    %c0_i32 = arith.constant 0 : i32
    %c0_i32_0 = arith.constant 0 : i32
    return %arg0, %c0_i32 : i32, i32
  }
}

</mosaic_0001>

<llo_original>
// kernel: tpu_custom_call.1
$region0: #{tpu_custom_call.1}
  #allocation0 [shape = 'u32[]', space=smem, size = 0x4, offset = 0x4, fixed_abs, tag = 'smem constant byte address 0x4 - core index']
  #allocation1 [shape = 'u32[72,128]{1,0:T(1,128)}', space=vmem, size = 0x9000, scoped, tag = 'internal scratch']
  %s0 = inlined_call_operand.hbm [shape: bf16[8,128], index: 0, kind: input, shape index: {}]
  %s1 = inlined_call_operand.hbm [shape: bf16[128,128], index: 1, kind: input, shape index: {}]
  %s2 = inlined_call_operand.hbm [shape: bf16[128,128], index: 2, kind: input, shape index: {}]
  %s3 = inlined_call_operand.hbm [shape: f32[8,128], index: 3, kind: output, shape index: {}]
  %s4 = sld [smem:[#allocation0]]
  $region34: #{tpu_custom_call.1} parent=0
    _
  %s6 = ssub.s32 1, %s4
  %s7 = scalar_select 0, %s6, %s4
  $region1: #{tpu_custom_call.1} parent=0
    #allocation2 [shape = 'u8[2048]{0}', space=vmem, size = 0x800, scoped, tag = 'input window, operand 0, single buffered']
    #allocation3 [shape = 's32[1]{0}', space=sflag, size = 0x4, scoped, tag = 'scoped memory for tpu_custom_call.1']
    #allocation4 [shape = 's32[1]{0}', space=sflag, size = 0x4, scoped, tag = 'scoped memory for tpu_custom_call.1']
    #allocation5 [shape = 'u8[32768]{0}', space=vmem, size = 0x8000, scoped, tag = 'input window, operand 1, single buffered']
    #allocation6 [shape = 's32[1]{0}', space=sflag, size = 0x4, scoped, tag = 'scoped memory for tpu_custom_call.1']
    #allocation7 [shape = 'u8[32768]{0}', space=vmem, size = 0x8000, scoped, tag = 'input window, operand 2, single buffered']
    #allocation8 [shape = 'u8[4096]{0}', space=vmem, size = 0x1000, scoped, tag = 'output window, operand 0, single buffered']
    %8 = vsyncpa [#allocation3], 0
    %9 = vsyncpa [#allocation6], 0
    %10 = vsyncpa [#allocation4], 0
    // Predicated region
    $region2: #{tpu_custom_call.1} parent=1 // pred_check
      _
    $region3: #{tpu_custom_call.1} parent=1 // pred_check_branch
      %12 = sbr.rel (0) target = $region5
    $region4: #{tpu_custom_call.1} parent=1 // pred_region
      %14 = vsyncadd [#allocation3], 0
      %s16 = sshll.u32 %s0, 4
      %s17 = int_to_ptr.hbm [resolvable:$true] %s16
      %s18 = sshll.u32 [#allocation2], 4
      %s19 = int_to_ptr.vmem [resolvable:$true] %s18
      %21 = dma.hbm_to_vmem [thread:$0]  %s17, 64, %s19, [#allocation3]
    $region5: #{tpu_custom_call.1} parent=1 // pred_fallthru
      _
    // Predicated region
    $region6: #{tpu_custom_call.1} parent=1 // pred_check
      _
    $region7: #{tpu_custom_call.1} parent=1 // pred_check_branch
      %23 = sbr.rel (0) target = $region9
    $region8: #{tpu_custom_call.1} parent=1 // pred_region
      %25 = vsyncadd [#allocation6], 0
      %s26 = sshll.u32 %s1, 4
      %s27 = int_to_ptr.hbm [resolvable:$true] %s26
      %s28 = sshll.u32 [#allocation5], 4
      %s29 = int_to_ptr.vmem [resolvable:$true] %s28
      %34 = dma.hbm_to_vmem [thread:$0]  %s27, 1024, %s29, [#allocation6], 64, 64, 4
    $region9: #{tpu_custom_call.1} parent=1 // pred_fallthru
      _
    // Predicated region
    $region10: #{tpu_custom_call.1} parent=1 // pred_check
      _
    $region11: #{tpu_custom_call.1} parent=1 // pred_check_branch
      %36 = sbr.rel (0) target = $region13
    $region12: #{tpu_custom_call.1} parent=1 // pred_region
      %38 = vsyncadd [#allocation6], 0
      %s39 = sshll.u32 %s2, 4
      %s40 = int_to_ptr.hbm [resolvable:$true] %s39
      %s41 = sshll.u32 [#allocation7], 4
      %s42 = int_to_ptr.vmem [resolvable:$true] %s41
      %47 = dma.hbm_to_vmem [thread:$0]  %s40, 1024, %s42, [#allocation6], 64, 64, 4
    $region13: #{tpu_custom_call.1} parent=1 // pred_fallthru
      _
    // Predicated region
    $region14: #{tpu_custom_call.1} parent=1 // pred_check
      _
    $region15: #{tpu_custom_call.1} parent=1 // pred_check_branch
      %49 = sbr.rel (0) target = $region17
    $region16: #{tpu_custom_call.1} parent=1 // pred_region
      %51 = dma.done [#allocation3], 64
    $region17: #{tpu_custom_call.1} parent=1 // pred_fallthru
      _
    // Predicated region
    $region18: #{tpu_custom_call.1} parent=1 // pred_check
      _
    $region19: #{tpu_custom_call.1} parent=1 // pred_check_branch
      %53 = sbr.rel (0) target = $region21
    $region20: #{tpu_custom_call.1} parent=1 // pred_region
      %55 = dma.done [#allocation6], 1024
    $region21: #{tpu_custom_call.1} parent=1 // pred_fallthru
      _
    // Predicated region
    $region22: #{tpu_custom_call.1} parent=1 // pred_check
      _
    $region23: #{tpu_custom_call.1} parent=1 // pred_check_branch
      %57 = sbr.rel (0) target = $region25
    $region24: #{tpu_custom_call.1} parent=1 // pred_region
      %59 = dma.done [#allocation6], 1024
    $region25: #{tpu_custom_call.1} parent=1 // pred_fallthru
      _
    %v60 = vld [vmem:[#allocation2] sm:$0xf]
    %v61 = vld [vmem:[#allocation5] sm:$0xf]
    %v62 = vld [vmem:[#allocation5 + $0x4] sm:$0xf]
    %v63 = vld [vmem:[#allocation5 + $0x8] sm:$0xf]
    %v64 = vld [vmem:[#allocation5 + $0xc] sm:$0xf]
    %v65 = vld [vmem:[#allocation5 + $0x10] sm:$0xf]
    %v66 = vld [vmem:[#allocation5 + $0x14] sm:$0xf]
    %v67 = vld [vmem:[#allocation5 + $0x18] sm:$0xf]
    %v68 = vld [vmem:[#allocation5 + $0x1c] sm:$0xf]
    %v69 = vld [vmem:[#allocation5 + $0x20] sm:$0xf]
    %v70 = vld [vmem:[#allocation5 + $0x24] sm:$0xf]
    %v71 = vld [vmem:[#allocation5 + $0x28] sm:$0xf]
    %v72 = vld [vmem:[#allocation5 + $0x2c] sm:$0xf]
    %v73 = vld [vmem:[#allocation5 + $0x30] sm:$0xf]
    %v74 = vld [vmem:[#allocation5 + $0x34] sm:$0xf]
    %v75 = vld [vmem:[#allocation5 + $0x38] sm:$0xf]
    %v76 = vld [vmem:[#allocation5 + $0x3c] sm:$0xf]
    %v93 = vunpack.c.l.b16 %v61
    %v94 = vunpack.c.l.b16 %v62
    %v95 = vunpack.c.l.b16 %v63
    %v96 = vunpack.c.l.b16 %v64
    %v97 = vunpack.c.l.b16 %v65
    %v98 = vunpack.c.l.b16 %v66
    %v99 = vunpack.c.l.b16 %v67
    %v100 = vunpack.c.l.b16 %v68
    %v101 = vunpack.c.l.b16 %v69
    %v102 = vunpack.c.l.b16 %v70
    %v103 = vunpack.c.l.b16 %v71
    %v104 = vunpack.c.l.b16 %v72
    %v105 = vunpack.c.l.b16 %v73
    %v106 = vunpack.c.l.b16 %v74
    %v107 = vunpack.c.l.b16 %v75
    %v108 = vunpack.c.l.b16 %v76
    %v109 = vpack.c.b16 %v94, %v93
    %v110 = vpack.c.b16 %v96, %v95
    %v111 = vpack.c.b16 %v98, %v97
    %v112 = vpack.c.b16 %v100, %v99
    %v113 = vpack.c.b16 %v102, %v101
    %v114 = vpack.c.b16 %v104, %v103
    %v115 = vpack.c.b16 %v106, %v105
    %v116 = vpack.c.b16 %v108, %v107
    %125 = vmatpush.bf16.msra.mxu0 %v116
    %126 = vmatpush.bf16.msra.mxu0 %v115
    %127 = vmatpush.bf16.msra.mxu0 %v114
    %128 = vmatpush.bf16.msra.mxu0 %v113
    %129 = vmatpush.bf16.msra.mxu0 %v112
    %130 = vmatpush.bf16.msra.mxu0 %v111
    %131 = vmatpush.bf16.msra.mxu0 %v110
    %132 = vmatpush.bf16.msra.mxu0 %v109
    %133 = vmatmul.bf16.gmra.mxu0 %v60
    %v134 = vpop.f32.mrf.mxu0
    %v135 = vadd.f32 0.0, %v134
    %v136 = vpop.f32.mrf.mxu0
    %137 = vdwg.mxu0
    %v138 = vpack.c.bf16 %v135, %v135
    %v139 = vld [vmem:[#allocation7] sm:$0xf]
    %v140 = vld [vmem:[#allocation7 + $0x4] sm:$0xf]
    %v141 = vld [vmem:[#allocation7 + $0x8] sm:$0xf]
    %v142 = vld [vmem:[#allocation7 + $0xc] sm:$0xf]
    %v143 = vld [vmem:[#allocation7 + $0x10] sm:$0xf]
    %v144 = vld [vmem:[#allocation7 + $0x14] sm:$0xf]
    %v145 = vld [vmem:[#allocation7 + $0x18] sm:$0xf]
    %v146 = vld [vmem:[#allocation7 + $0x1c] sm:$0xf]
    %v147 = vld [vmem:[#allocation7 + $0x20] sm:$0xf]
    %v148 = vld [vmem:[#allocation7 + $0x24] sm:$0xf]
    %v149 = vld [vmem:[#allocation7 + $0x28] sm:$0xf]
    %v150 = vld [vmem:[#allocation7 + $0x2c] sm:$0xf]
    %v151 = vld [vmem:[#allocation7 + $0x30] sm:$0xf]
    %v152 = vld [vmem:[#allocation7 + $0x34] sm:$0xf]
    %v153 = vld [vmem:[#allocation7 + $0x38] sm:$0xf]
    %v154 = vld [vmem:[#allocation7 + $0x3c] sm:$0xf]
    %v171 = vunpack.c.l.b16 %v139
    %v172 = vunpack.c.l.b16 %v140
    %v173 = vunpack.c.l.b16 %v141
    %v174 = vunpack.c.l.b16 %v142
    %v175 = vunpack.c.l.b16 %v143
    %v176 = vunpack.c.l.b16 %v144
    %v177 = vunpack.c.l.b16 %v145
    %v178 = vunpack.c.l.b16 %v146
    %v179 = vunpack.c.l.b16 %v147
    %v180 = vunpack.c.l.b16 %v148
    %v181 = vunpack.c.l.b16 %v149
    %v182 = vunpack.c.l.b16 %v150
    %v183 = vunpack.c.l.b16 %v151
    %v184 = vunpack.c.l.b16 %v152
    %v185 = vunpack.c.l.b16 %v153
    %v186 = vunpack.c.l.b16 %v154
    %v187 = vpack.c.b16 %v172, %v171
    %v188 = vpack.c.b16 %v174, %v173
    %v189 = vpack.c.b16 %v176, %v175
    %v190 = vpack.c.b16 %v178, %v177
    %v191 = vpack.c.b16 %v180, %v179
    %v192 = vpack.c.b16 %v182, %v181
    %v193 = vpack.c.b16 %v184, %v183
    %v194 = vpack.c.b16 %v186, %v185
    %203 = vmatpush.bf16.msra.mxu0 %v194
    %204 = vmatpush.bf16.msra.mxu0 %v193
    %205 = vmatpush.bf16.msra.mxu0 %v192
    %206 = vmatpush.bf16.msra.mxu0 %v191
    %207 = vmatpush.bf16.msra.mxu0 %v190
    %208 = vmatpush.bf16.msra.mxu0 %v189
    %209 = vmatpush.bf16.msra.mxu0 %v188
    %210 = vmatpush.bf16.msra.mxu0 %v187
    %211 = vmatmul.bf16.gmra.mxu0 %v138
    %v212 = vpop.f32.mrf.mxu0
    %v213 = vadd.f32 0.0, %v212
    %v214 = vpop.f32.mrf.mxu0
    %215 = vdwg.mxu0
    %216 = vst [vmem:[#allocation8] sm:$0xff] %v213
    // Predicated region
    $region26: #{tpu_custom_call.1} parent=1 // pred_check
      _
    $region27: #{tpu_custom_call.1} parent=1 // pred_check_branch
      %218 = sbr.rel (0) target = $region29
    $region28: #{tpu_custom_call.1} parent=1 // pred_region
      %220 = vsyncadd [#allocation4], 0
      %s222 = sshll.u32 [#allocation8], 4
      %s223 = int_to_ptr.vmem [resolvable:$true] %s222
      %s224 = sshll.u32 %s3, 4
      %s225 = int_to_ptr.hbm [resolvable:$true] %s224
      %227 = dma.vmem_to_hbm [thread:$0]  %s223, 128, %s225, [#allocation4]
    $region29: #{tpu_custom_call.1} parent=1 // pred_fallthru
      _
    // Predicated region
    $region30: #{tpu_custom_call.1} parent=1 // pred_check
      _
    $region31: #{tpu_custom_call.1} parent=1 // pred_check_branch
      %229 = sbr.rel (0) target = $region33
    $region32: #{tpu_custom_call.1} parent=1 // pred_region
      %231 = dma.done [#allocation4], 128
    $region33: #{tpu_custom_call.1} parent=1 // pred_fallthru
      _
    %232 = vsyncpa [#allocation3], 1
    %233 = vsyncpa [#allocation6], 1
    %234 = vsyncpa [#allocation4], 1

</llo_original>
